<compile_context>
chip_gen: v7x
topology: tpu7x:2x2x1
jax: 0.10.0
libtpu: 0.0.40
codegen_flags: <defaults>
</compile_context>

<pallas_src>
import functools

import numpy as np
import jax
import jax.numpy as jnp
from jax.experimental import pallas as pl
from jax.experimental.pallas import tpu as pltpu

# ----------------------------- irreps config --------------------------------
MUL_IN_S, MUL_IN_V = 8, 8          # irreps_in  = 8x0e + 8x1o
MUL_H_S, MUL_H_V = 4, 4            # hidden     = 4x0e + 4x1o
MUL_O_S, MUL_O_V = 2, 2            # output     = 2x0e + 2x1o

D_IN = MUL_IN_S + 3 * MUL_IN_V     # 32
D_H = MUL_H_S + 3 * MUL_H_V        # 16
D_OUT = MUL_O_S + 3 * MUL_O_V      # 8

FOLD = 16                          # folded rows per lane-row: 16*32 = 512 in-lanes,
                                   #                           16*8  = 128 out-lanes


def _normalize2mom_const():
    # e3nn normalize2mom: cst s.t. E[(cst*act(z))^2] = 1 for z ~ N(0,1).
    # Computed deterministically with Gauss-Hermite quadrature (gate = SiLU).
    # TODO(synk): e3nn bakes in a Monte-Carlo estimate of this constant; match
    # its exact value when comparing bit-for-bit against the torch module.
    xs, ws = np.polynomial.hermite.hermgauss(200)
    z = np.sqrt(2.0) * xs
    silu = z / (1.0 + np.exp(-z))
    second_moment = float(np.sum(ws * silu * silu) / np.sqrt(np.pi))
    return float(1.0 / np.sqrt(second_moment))


ACT_CST = _normalize2mom_const()


def _cdiv(a, b):
    return -(-a // b)


def _round_up(a, b):
    return _cdiv(a, b) * b


def _equivariant_linear_matrix(key, mul_in_s, mul_in_v, mul_out_s, mul_out_v):
    """Dense (D_in, D_out) matrix equivalent to an e3nn o3.Linear."""
    k_s, k_v = jax.random.split(key)
    w_s = jax.random.normal(k_s, (mul_in_s, mul_out_s), jnp.float32)
    w_v = jax.random.normal(k_v, (mul_in_v, mul_out_v), jnp.float32)
    w_s = w_s / jnp.sqrt(jnp.float32(mul_in_s))
    w_v = w_v / jnp.sqrt(jnp.float32(mul_in_v))
    d_in = mul_in_s + 3 * mul_in_v
    d_out = mul_out_s + 3 * mul_out_v
    full = jnp.zeros((d_in, d_out), jnp.float32)
    full = full.at[:mul_in_s, :mul_out_s].set(w_s)
    full = full.at[mul_in_s:, mul_out_s:].set(
        jnp.kron(w_v, jnp.eye(3, dtype=jnp.float32)))
    return full


# -------------------------- folded weight prep -------------------------------
def prepare_folded_weights(w1, w2, w3, *, fold=FOLD, dtype=jnp.bfloat16):
    """Build the lane-folded weights once per model (cache the result).

    * normalize2mom gate constant folded into the scalar input rows of the
      *next* linear:  (cst*silu(h)) @ W  ==  silu(h) @ (cst-scaled-rows W).
    * block-diagonal replication kron(I_fold, W) so FOLD consecutive rows of x
      can ride the lane axis.
    * cast to bf16 for MXU-friendly matmuls (accumulation stays f32 in-kernel).
    """
    w2s = w2.at[:MUL_H_S, :].multiply(ACT_CST)
    w3s = w3.at[:MUL_H_S, :].multiply(ACT_CST)
    eye_f = jnp.eye(fold, dtype=jnp.float32)
    w1b = jnp.kron(eye_f, w1).astype(dtype)   # (fold*32, fold*16)
    w2b = jnp.kron(eye_f, w2s).astype(dtype)  # (fold*16, fold*16)
    w3b = jnp.kron(eye_f, w3s).astype(dtype)  # (fold*16, fold*8)
    return w1b, w2b, w3b


# ------------------------------- kernel -------------------------------------
def _readout_kernel(x_ref, w1_ref, w2_ref, w3_ref, o_ref, *, fold):
    # Gate mask: l=0 scalar slots are the first MUL_H_S columns of every
    # D_H-wide folded hidden block.  Cheap in-kernel iota; no extra DMA stream.
    col = jax.lax.broadcasted_iota(jnp.int32, (1, fold * D_H), 1)
    scalar_cols = (col % D_H) < MUL_H_S                     # (1, fold*D_H) bool

    # bf16 MXU matmuls with f32 accumulation; activations stay f32 on the VPU.
    x = x_ref[...].astype(jnp.bfloat16)                     # (block_rows, fold*D_IN)

    h = jnp.dot(x, w1_ref[...], preferred_element_type=jnp.float32)
    h = jnp.where(scalar_cols, jax.nn.silu(h), h)           # normalize2mom folded into w2

    h = jnp.dot(h.astype(jnp.bfloat16), w2_ref[...],
                preferred_element_type=jnp.float32)
    h = jnp.where(scalar_cols, jax.nn.silu(h), h)           # normalize2mom folded into w3

    y = jnp.dot(h.astype(jnp.bfloat16), w3_ref[...],
                preferred_element_type=jnp.float32)
    o_ref[...] = y.astype(o_ref.dtype)


def custom_nonlinear_readout(x, folded_weights, *, fold=FOLD, max_block_rows=1024):
    """x: (N, 32); folded_weights = prepare_folded_weights(w1, w2, w3).

    Returns (N, 8) in x.dtype.
    """
    n, d_in = x.shape
    assert d_in == D_IN
    w1b, w2b, w3b = folded_weights

    # --- fold rows into lanes so every operand / the output is 128-lane dense.
    # Only pad N to a multiple of `fold`; the grid tail is masked by Pallas.
    n_pad = _round_up(n, fold)
    if n_pad != n:
        x = jnp.pad(x, ((0, n_pad - n), (0, 0)))
    n_fold = n_pad // fold
    xf = x.reshape(n_fold, fold * D_IN)                     # (N/fold, fold*32)

    # block_rows: multiple of 8, <= max_block_rows, aiming for >= 4 grid steps
    # (at least 2) so v7x can shard the parallel row axis across both
    # TensorCores and the BlockSpec pipeline overlaps DMA with compute.
    if n_fold <= 8:
        block_rows = n_fold                                 # full-extent block
    else:
        block_rows = min(max_block_rows, _round_up(_cdiv(n_fold, 4), 8))
    grid = (_cdiv(n_fold, block_rows),)

    kernel = functools.partial(_readout_kernel, fold=fold)
    out = pl.pallas_call(
        kernel,
        out_shape=jax.ShapeDtypeStruct((n_fold, fold * D_OUT), x.dtype),
        grid_spec=pltpu.PrefetchScalarGridSpec(
            num_scalar_prefetch=0,
            grid=grid,
            in_specs=[
                pl.BlockSpec((block_rows, fold * D_IN), lambda i: (i, 0)),
                pl.BlockSpec((fold * D_IN, fold * D_H), lambda i: (0, 0)),
                pl.BlockSpec((fold * D_H, fold * D_H), lambda i: (0, 0)),
                pl.BlockSpec((fold * D_H, fold * D_OUT), lambda i: (0, 0)),
            ],
            out_specs=pl.BlockSpec((block_rows, fold * D_OUT), lambda i: (i, 0)),
        ),
        # Row grid has no carry -> parallel (v7x shards across both TCs; no-op
        # on v5e/v6e).  Double-buffered VMEM footprint ~6 MiB at block_rows
        # =1024 (f32 x/out tiles + resident bf16 weights) — under all defaults.
        compiler_params=pltpu.CompilerParams(dimension_semantics=("parallel",)),
    )(xf, w1b, w2b, w3b)

    return out.reshape(n_pad, D_OUT)[:n]


# --------------------------- pure-JAX reference ------------------------------
def _reference(x, w1, w2, w3):
    mask = jnp.arange(D_H) < MUL_H_S
    h = x @ w1
    h = jnp.where(mask, ACT_CST * jax.nn.silu(h), h)
    h = h @ w2
    h = jnp.where(mask, ACT_CST * jax.nn.silu(h), h)
    return h @ w3


if __name__ == "__main__":
    key = jax.random.PRNGKey(0)
    kx, k1, k2, k3 = jax.random.split(key, 4)

    N = 200  # number of nodes (not a multiple of fold or block -> exercises masked tail)
    x = jax.random.normal(kx, (N, D_IN), jnp.float32)

    # deterministic synthetic parameters (linear_1, linear_2, linear_3)
    w1 = _equivariant_linear_matrix(k1, MUL_IN_S, MUL_IN_V, MUL_H_S, MUL_H_V)  # (32, 16)
    w2 = _equivariant_linear_matrix(k2, MUL_H_S, MUL_H_V, MUL_H_S, MUL_H_V)    # (16, 16)
    w3 = _equivariant_linear_matrix(k3, MUL_H_S, MUL_H_V, MUL_O_S, MUL_O_V)    # (16, 8)

    # Folded weights built ONCE per model and reused across forward calls.
    folded = prepare_folded_weights(w1, w2, w3)
    folded = jax.tree_util.tree_map(jax.block_until_ready, folded)

    out = custom_nonlinear_readout(x, folded)
    out = jax.block_until_ready(out)

    ref = _reference(x, w1, w2, w3)
    assert out.shape == (N, D_OUT)
    # bf16 matmuls with f32 accumulation -> loosened tolerance vs. pure-f32 ref.
    assert jnp.allclose(out, ref, atol=5e-2, rtol=5e-2)
    print("KERNEL_OK")
</pallas_src>

<mosaic_0001>
module attributes {stable_mosaic.version = 11 : i64} {
  func.func @_readout_kernel(%arg0: i32, %arg1: memref<8x512xf32, #tpu.memory_space<vmem>>, %arg2: memref<512x256xbf16, #tpu.memory_space<vmem>>, %arg3: memref<256x256xbf16, #tpu.memory_space<vmem>>, %arg4: memref<256x128xbf16, #tpu.memory_space<vmem>>, %arg5: memref<8x128xf32, #tpu.memory_space<vmem>>) attributes {dimension_semantics = [#tpu.dimension_semantics<parallel>], iteration_bounds = array<i64: 2>, scalar_prefetch = 0 : i64, scratch_operands = 0 : i64, tpu.core_type = #tpu.core_type<tc>, window_params = [{transform_indices = @transform_0, window_bounds = array<i64: 8, 512>}, {pipeline_mode = #tpu.pipeline_mode<synchronous>, transform_indices = @transform_1, window_bounds = array<i64: 512, 256>}, {pipeline_mode = #tpu.pipeline_mode<synchronous>, transform_indices = @transform_2, window_bounds = array<i64: 256, 256>}, {pipeline_mode = #tpu.pipeline_mode<synchronous>, transform_indices = @transform_3, window_bounds = array<i64: 256, 128>}, {transform_indices = @transform_4, window_bounds = array<i64: 8, 128>}]} {
    %0 = tpu.iota {dimensions = array<i32: 1>} : vector<1x256xi32>
    %c16_i32 = arith.constant 16 : i32
    %c0_i32 = arith.constant 0 : i32
    %1 = arith.cmpi eq, %c16_i32, %c0_i32 : i32
    %c1_i32 = arith.constant 1 : i32
    %2 = arith.select %1, %c1_i32, %c16_i32 : i32
    %3 = vector.broadcast %2 : i32 to vector<1x256xi32>
    %4 = arith.remsi %0, %3 : vector<1x256xi32>
    %c0_i32_0 = arith.constant 0 : i32
    %5 = vector.broadcast %c0_i32_0 : i32 to vector<1x256xi32>
    %6 = arith.cmpi ne, %4, %5 : vector<1x256xi32>
    %c0_i32_1 = arith.constant 0 : i32
    %7 = vector.broadcast %c0_i32_1 : i32 to vector<1x256xi32>
    %8 = arith.cmpi slt, %4, %7 : vector<1x256xi32>
    %c0_i32_2 = arith.constant 0 : i32
    %9 = arith.cmpi slt, %2, %c0_i32_2 : i32
    %10 = vector.broadcast %9 : i1 to vector<1x256xi1>
    %11 = vector.broadcast %10 : vector<1x256xi1> to vector<1x256xi1>
    %12 = arith.xori %8, %11 : vector<1x256xi1>
    %13 = arith.andi %12, %6 : vector<1x256xi1>
    %14 = vector.broadcast %2 : i32 to vector<1x256xi32>
    %15 = arith.addi %4, %14 : vector<1x256xi32>
    %16 = arith.select %13, %15, %4 : vector<1x256xi1>, vector<1x256xi32>
    %c4_i32 = arith.constant 4 : i32
    %17 = vector.broadcast %c4_i32 : i32 to vector<1x256xi32>
    %18 = arith.cmpi slt, %16, %17 : vector<1x256xi32>
    %c0 = arith.constant 0 : index
    %c0_3 = arith.constant 0 : index
    %19 = vector.load %arg1[%c0, %c0_3] : memref<8x512xf32, #tpu.memory_space<vmem>>, vector<8x512xf32>
    %20 = arith.truncf %19 : vector<8x512xf32> to vector<8x512xbf16>
    %c0_4 = arith.constant 0 : index
    %c0_5 = arith.constant 0 : index
    %21 = vector.load %arg2[%c0_4, %c0_5] : memref<512x256xbf16, #tpu.memory_space<vmem>>, vector<512x256xbf16>
    %cst = arith.constant dense<0.000000e+00> : vector<8x256xf32>
    %22 = tpu.matmul %20, %21, %cst {dimension_numbers = #tpu.dot_dimension_numbers<[1], [0], [0], [1], [0, 0, 1, 1], [], []>} : vector<8x512xbf16>, vector<512x256xbf16>, vector<8x256xf32> -> vector<8x256xf32>
    %23 = arith.negf %22 : vector<8x256xf32>
    %24 = math.exp %23 : vector<8x256xf32>
    %cst_6 = arith.constant 1.000000e+00 : f32
    %25 = vector.broadcast %cst_6 : f32 to vector<8x256xf32>
    %26 = arith.addf %25, %24 : vector<8x256xf32>
    %27 = arith.divf %25, %26 : vector<8x256xf32>
    %28 = arith.mulf %22, %27 : vector<8x256xf32>
    %29 = vector.shape_cast %18 : vector<1x256xi1> to vector<1x256xi1>
    %30 = vector.broadcast %29 : vector<1x256xi1> to vector<8x256xi1>
    %31 = arith.select %30, %28, %22 : vector<8x256xi1>, vector<8x256xf32>
    %32 = arith.truncf %31 : vector<8x256xf32> to vector<8x256xbf16>
    %c0_7 = arith.constant 0 : index
    %c0_8 = arith.constant 0 : index
    %33 = vector.load %arg3[%c0_7, %c0_8] : memref<256x256xbf16, #tpu.memory_space<vmem>>, vector<256x256xbf16>
    %cst_9 = arith.constant dense<0.000000e+00> : vector<8x256xf32>
    %34 = tpu.matmul %32, %33, %cst_9 {dimension_numbers = #tpu.dot_dimension_numbers<[1], [0], [0], [1], [0, 0, 1, 1], [], []>} : vector<8x256xbf16>, vector<256x256xbf16>, vector<8x256xf32> -> vector<8x256xf32>
    %35 = arith.negf %34 : vector<8x256xf32>
    %36 = math.exp %35 : vector<8x256xf32>
    %cst_10 = arith.constant 1.000000e+00 : f32
    %37 = vector.broadcast %cst_10 : f32 to vector<8x256xf32>
    %38 = arith.addf %37, %36 : vector<8x256xf32>
    %39 = arith.divf %37, %38 : vector<8x256xf32>
    %40 = arith.mulf %34, %39 : vector<8x256xf32>
    %41 = vector.shape_cast %18 : vector<1x256xi1> to vector<1x256xi1>
    %42 = vector.broadcast %41 : vector<1x256xi1> to vector<8x256xi1>
    %43 = arith.select %42, %40, %34 : vector<8x256xi1>, vector<8x256xf32>
    %44 = arith.truncf %43 : vector<8x256xf32> to vector<8x256xbf16>
    %c0_11 = arith.constant 0 : index
    %c0_12 = arith.constant 0 : index
    %45 = vector.load %arg4[%c0_11, %c0_12] : memref<256x128xbf16, #tpu.memory_space<vmem>>, vector<256x128xbf16>
    %cst_13 = arith.constant dense<0.000000e+00> : vector<8x128xf32>
    %46 = tpu.matmul %44, %45, %cst_13 {dimension_numbers = #tpu.dot_dimension_numbers<[1], [0], [0], [1], [0, 0, 1, 1], [], []>} : vector<8x256xbf16>, vector<256x128xbf16>, vector<8x128xf32> -> vector<8x128xf32>
    %c0_14 = arith.constant 0 : index
    %c0_15 = arith.constant 0 : index
    %47 = vector.load %arg5[%c0_14, %c0_15] : memref<8x128xf32, #tpu.memory_space<vmem>>, vector<8x128xf32>
    tpu.vector_store %arg5[%c0_14, %c0_15], %46 {strides = array<i32>} : memref<8x128xf32, #tpu.memory_space<vmem>>, vector<8x128xf32>,
    return
  }
  func.func @transform_0(%arg0: i32) -> (i32, i32) {
    %c0_i32 = arith.constant 0 : i32
    %c0_i32_0 = arith.constant 0 : i32
    return %arg0, %c0_i32 : i32, i32
  }
  func.func @transform_1(%arg0: i32) -> (i32, i32) {
    %c0_i32 = arith.constant 0 : i32
    %c0_i32_0 = arith.constant 0 : i32
    %c0_i32_1 = arith.constant 0 : i32
    return %c0_i32, %c0_i32_0 : i32, i32
  }
  func.func @transform_2(%arg0: i32) -> (i32, i32) {
    %c0_i32 = arith.constant 0 : i32
    %c0_i32_0 = arith.constant 0 : i32
    %c0_i32_1 = arith.constant 0 : i32
    return %c0_i32, %c0_i32_0 : i32, i32
  }
  func.func @transform_3(%arg0: i32) -> (i32, i32) {
    %c0_i32 = arith.constant 0 : i32
    %c0_i32_0 = arith.constant 0 : i32
    %c0_i32_1 = arith.constant 0 : i32
    return %c0_i32, %c0_i32_0 : i32, i32
  }
  func.func @transform_4(%arg0: i32) -> (i32, i32) {
    %c0_i32 = arith.constant 0 : i32
    %c0_i32_0 = arith.constant 0 : i32
    return %arg0, %c0_i32 : i32, i32
  }
}

</mosaic_0001>

<llo_original>
// kernel: tpu_custom_call.1
$region0: #{tpu_custom_call.1}
  #allocation0 [shape = 'u32[]', space=smem, size = 0x4, offset = 0x4, fixed_abs, tag = 'smem constant byte address 0x4 - core index']
  #allocation1 [shape = 'u32[144,128]{1,0:T(1,128)}', space=vmem, size = 0x12000, scoped, tag = 'internal scratch']
  %s0 = inlined_call_operand.hbm [shape: f32[13,512], index: 0, kind: input, shape index: {}]
  %s1 = inlined_call_operand.hbm [shape: bf16[512,256], index: 1, kind: input, shape index: {}]
  %s2 = inlined_call_operand.hbm [shape: bf16[256,256], index: 2, kind: input, shape index: {}]
  %s3 = inlined_call_operand.hbm [shape: bf16[256,128], index: 3, kind: input, shape index: {}]
  %s4 = inlined_call_operand.hbm [shape: f32[13,128], index: 4, kind: output, shape index: {}]
  %s5 = sld [smem:[#allocation0]]
  $region65: #{tpu_custom_call.1} parent=0
    _
  %s7 = ssub.s32 1, %s5
  %s8 = scalar_select 0, %s7, %s5
  $region1: #{tpu_custom_call.1} parent=0
    #allocation2 [shape = 'u8[32768]{0}', space=vmem, size = 0x8000, scoped, tag = 'input window, operand 0']
    #allocation3 [shape = 's32[2]{0}', space=sflag, size = 0x8, scoped, tag = 'scoped memory for tpu_custom_call.1']
    #allocation4 [shape = 's32[2]{0}', space=sflag, size = 0x8, scoped, tag = 'scoped memory for tpu_custom_call.1']
    #allocation5 [shape = 'u8[262144]{0}', space=vmem, size = 0x40000, scoped, tag = 'input window, operand 1, single buffered']
    #allocation6 [shape = 's32[1]{0}', space=sflag, size = 0x4, scoped, tag = 'scoped memory for tpu_custom_call.1']
    #allocation7 [shape = 'u8[131072]{0}', space=vmem, size = 0x20000, scoped, tag = 'input window, operand 2, single buffered']
    #allocation8 [shape = 'u8[65536]{0}', space=vmem, size = 0x10000, scoped, tag = 'input window, operand 3, single buffered']
    #allocation9 [shape = 's32[1]{0}', space=sflag, size = 0x4, scoped, tag = 'scoped memory for tpu_custom_call.1']
    #allocation10 [shape = 'u8[8192]{0}', space=vmem, size = 0x2000, scoped, tag = 'output window, operand 0']
    %9 = vsyncpa [#allocation3], 0
    %s10 = scalar_lea.sflag [#allocation3], 1
    %11 = vsyncpa %s10, 0
    %12 = vsyncpa [#allocation6], 0
    %13 = vsyncpa [#allocation9], 0
    %14 = vsyncpa [#allocation4], 0
    %s15 = scalar_lea.sflag [#allocation4], 1
    %16 = vsyncpa %s15, 0
    loop: start=0, step=1, limit=4
    $region2: #{tpu_custom_call.1} parent=1 // loop_pre_header
      _
    $region3: #{tpu_custom_call.1} parent=1 // loop_header
      %s18 = sphi 0, %s22
      %p19 = scmp.ge.s32.totalorder %s18, 4
      %s28 = sphi 0, %s30
      %s31 = sphi 0, %s28
      %s32 = sphi 0, %s31
      %s48 = sphi 0, %s32
      %s52 = sphi 0, %s52
      %s54 = sphi 0, %s52
      %s55 = sphi 0, %s54
      %s69 = sphi 0, %s55
      %s73 = sphi 0, %s73
      %s75 = sphi 0, %s73
      %s76 = sphi 0, %s75
      %s90 = sphi 0, %s76
      %s94 = sphi 0, %s94
      %s96 = sphi 0, %s94
      %s97 = sphi 0, %s96
      %s111 = sphi 0, %s97
      %s117 = sphi 0, %s119
      %s120 = sphi 0, %s117
      %s121 = sphi 0, %s120
      %s137 = sphi 0, %s121
    $region4: #{tpu_custom_call.1} parent=1 // loop_header_branch
      %21 = sbr.rel (%p19) target = $region8
    $region5: #{tpu_custom_call.1} parent=1 // loop_body
      %s23 = ssub.s32 %s18, 1
      %s24 = ssub.s32 %s18, 2
      %s25 = sadd.s32 %s18, 1
      %s26 = ssub.s32 %s18, %s25
      %p27 = scmp.eq.s32.totalorder %s26, 0
      %s29 = sadd.s32 %s28, 1
      %s30 = scalar_select %p27, %s28, %s29
      %p33 = pneg %p27
      %p34 = scmp.eq.s32.totalorder %s18, 1
      %p35 = por %p33, %p34
      %p36 = scmp.ne.s32.totalorder %s28, %s31
      %p37 = scmp.eq.s32.totalorder %s18, 0
      %p38 = por %p36, %p37
      %p39 = scmp.ne.s32.totalorder %s28, %s31
      %p40 = scmp.eq.s32.totalorder %s23, 1
      %p41 = por %p39, %p40
      %p42 = scmp.ne.s32.totalorder %s31, %s32
      %p43 = scmp.eq.s32.totalorder %s23, 0
      %p44 = por %p42, %p43
      %p45 = scmp.ne.s32.totalorder %s31, %s32
      %p46 = scmp.eq.s32.totalorder %s24, 1
      %p47 = por %p45, %p46
      %p49 = scmp.ne.s32.totalorder %s32, %s48
      %p50 = scmp.eq.s32.totalorder %s24, 0
      %p51 = por %p49, %p50
      %s53 = sadd.s32 %s52, 1
      %p56 = scmp.eq.s32.totalorder %s18, 1
      %p57 = scmp.ne.s32.totalorder %s52, %s54
      %p58 = scmp.eq.s32.totalorder %s18, 0
      %p59 = por %p57, %p58
      %p60 = scmp.ne.s32.totalorder %s52, %s54
      %p61 = scmp.eq.s32.totalorder %s23, 1
      %p62 = por %p60, %p61
      %p63 = scmp.ne.s32.totalorder %s54, %s55
      %p64 = scmp.eq.s32.totalorder %s23, 0
      %p65 = por %p63, %p64
      %p66 = scmp.ne.s32.totalorder %s54, %s55
      %p67 = scmp.eq.s32.totalorder %s24, 1
      %p68 = por %p66, %p67
      %p70 = scmp.ne.s32.totalorder %s55, %s69
      %p71 = scmp.eq.s32.totalorder %s24, 0
      %p72 = por %p70, %p71
      %s74 = sadd.s32 %s73, 1
      %p77 = scmp.eq.s32.totalorder %s18, 1
      %p78 = scmp.ne.s32.totalorder %s73, %s75
      %p79 = scmp.eq.s32.totalorder %s18, 0
      %p80 = por %p78, %p79
      %p81 = scmp.ne.s32.totalorder %s73, %s75
      %p82 = scmp.eq.s32.totalorder %s23, 1
      %p83 = por %p81, %p82
      %p84 = scmp.ne.s32.totalorder %s75, %s76
      %p85 = scmp.eq.s32.totalorder %s23, 0
      %p86 = por %p84, %p85
      %p87 = scmp.ne.s32.totalorder %s75, %s76
      %p88 = scmp.eq.s32.totalorder %s24, 1
      %p89 = por %p87, %p88
      %p91 = scmp.ne.s32.totalorder %s76, %s90
      %p92 = scmp.eq.s32.totalorder %s24, 0
      %p93 = por %p91, %p92
      %s95 = sadd.s32 %s94, 1
      %p98 = scmp.eq.s32.totalorder %s18, 1
      %p99 = scmp.ne.s32.totalorder %s94, %s96
      %p100 = scmp.eq.s32.totalorder %s18, 0
      %p101 = por %p99, %p100
      %p102 = scmp.ne.s32.totalorder %s94, %s96
      %p103 = scmp.eq.s32.totalorder %s23, 1
      %p104 = por %p102, %p103
      %p105 = scmp.ne.s32.totalorder %s96, %s97
      %p106 = scmp.eq.s32.totalorder %s23, 0
      %p107 = por %p105, %p106
      %p108 = scmp.ne.s32.totalorder %s96, %s97
      %p109 = scmp.eq.s32.totalorder %s24, 1
      %p110 = por %p108, %p109
      %p112 = scmp.ne.s32.totalorder %s97, %s111
      %p113 = scmp.eq.s32.totalorder %s24, 0
      %p114 = por %p112, %p113
      %s115 = ssub.s32 %s18, %s25
      %p116 = scmp.eq.s32.totalorder %s115, 0
      %s118 = sadd.s32 %s117, 1
      %s119 = scalar_select %p116, %s117, %s118
      %p122 = pneg %p116
      %p123 = scmp.eq.s32.totalorder %s18, 1
      %p124 = por %p122, %p123
      %p125 = scmp.ne.s32.totalorder %s117, %s120
      %p126 = scmp.eq.s32.totalorder %s18, 0
      %p127 = por %p125, %p126
      %p128 = scmp.ne.s32.totalorder %s117, %s120
      %p129 = scmp.eq.s32.totalorder %s23, 1
      %p130 = por %p128, %p129
      %p131 = scmp.ne.s32.totalorder %s120, %s121
      %p132 = scmp.eq.s32.totalorder %s23, 0
      %p133 = por %p131, %p132
      %p134 = scmp.ne.s32.totalorder %s120, %s121
      %p135 = scmp.eq.s32.totalorder %s24, 1
      %p136 = por %p134, %p135
      %p138 = scmp.ne.s32.totalorder %s121, %s137
      %p139 = scmp.eq.s32.totalorder %s24, 0
      %p140 = por %p138, %p139
      %p141 = scmp.le.s32.totalorder 1, %s18
      %p142 = scmp.lt.s32.totalorder %s18, 3
      %p143 = pnand %p141, %p142
      %p144 = pneg %p143
      // Predicated region
      $region9: #{tpu_custom_call.1} parent=5 // pred_check
        _
      $region10: #{tpu_custom_call.1} parent=5 // pred_check_branch
        %146 = sbr.rel (%p143) target = $region12
      $region11: #{tpu_custom_call.1} parent=5 // pred_region
        %s147 = ssub.s32 %s18, 1
        // Predicated region
        $region13: #{tpu_custom_call.1} parent=11 // pred_check
          %p148 = pneg %p65
        $region14: #{tpu_custom_call.1} parent=11 // pred_check_branch
          %150 = sbr.rel (%p148) target = $region16
        $region15: #{tpu_custom_call.1} parent=11 // pred_region
          %s152 = ssub.s32 8192, 8192
          %153 = vsyncadd [#allocation6], %s152
          %s154 = sshll.u32 [#allocation5], 4
          %s155 = int_to_ptr.vmem [resolvable:$true] %s154
          %160 = dma.hbm_to_vmem [thread:$0]  %s1, 8192, %s155, [#allocation6], 128, 128, 8
        $region16: #{tpu_custom_call.1} parent=11 // pred_fallthru
          _
        // Predicated region
        $region17: #{tpu_custom_call.1} parent=11 // pred_check
          %p161 = pneg %p86
        $region18: #{tpu_custom_call.1} parent=11 // pred_check_branch
          %163 = sbr.rel (%p161) target = $region20
        $region19: #{tpu_custom_call.1} parent=11 // pred_region
          %s165 = ssub.s32 4096, 4096
          %166 = vsyncadd [#allocation6], %s165
          %s167 = sshll.u32 [#allocation7], 4
          %s168 = int_to_ptr.vmem [resolvable:$true] %s167
          %173 = dma.hbm_to_vmem [thread:$0]  %s2, 4096, %s168, [#allocation6], 128, 128, 8
        $region20: #{tpu_custom_call.1} parent=11 // pred_fallthru
          _
        // Predicated region
        $region21: #{tpu_custom_call.1} parent=11 // pred_check
          %p174 = pneg %p107
        $region22: #{tpu_custom_call.1} parent=11 // pred_check_branch
          %176 = sbr.rel (%p174) target = $region24
        $region23: #{tpu_custom_call.1} parent=11 // pred_region
          %s178 = ssub.s32 2048, 2048
          %179 = vsyncadd [#allocation9], %s178
          %s180 = sshll.u32 [#allocation8], 4
          %s181 = int_to_ptr.vmem [resolvable:$true] %s180
          %186 = dma.hbm_to_vmem [thread:$0]  %s3, 2048, %s181, [#allocation9], 64, 64, 4
        $region24: #{tpu_custom_call.1} parent=11 // pred_fallthru
          _
      $region12: #{tpu_custom_call.1} parent=5 // pred_fallthru
        _
      %p187 = scmp.lt.s32.totalorder %s18, 2
      // Predicated region
      $region25: #{tpu_custom_call.1} parent=5 // pred_check
        %p188 = pneg %p187
      $region26: #{tpu_custom_call.1} parent=5 // pred_check_branch
        %190 = sbr.rel (%p188) target = $region28
      $region27: #{tpu_custom_call.1} parent=5 // pred_region
        // Predicated region
        $region29: #{tpu_custom_call.1} parent=27 // pred_check
          %p191 = pneg %p38
        $region30: #{tpu_custom_call.1} parent=27 // pred_check_branch
          %193 = sbr.rel (%p191) target = $region32
        $region31: #{tpu_custom_call.1} parent=27 // pred_region
          %s194 = sand.u32 %s28, 1
          %s195 = scalar_lea.sflag [#allocation3], %s194
          %s196 = sand.u32 %s28, 1
          %s197 = smul.addr %s196, 32
          %s198 = scalar_lea.vmem [#allocation2], %s197
          %s200 = ssub.s32 512, 512
          %201 = vsyncadd %s195, %s200
          %s202 = smul.addr %s18, 4
          %s203 = smul.addr %s202, 128
          %s204 = scalar_lea.hbm %s0, %s203
          %s206 = sshll.u32 %s198, 4
          %s207 = int_to_ptr.vmem [resolvable:$true] %s206
          %209 = dma.hbm_to_vmem [thread:$0]  %s204, 512, %s207, %s195
        $region32: #{tpu_custom_call.1} parent=27 // pred_fallthru
          _
      $region28: #{tpu_custom_call.1} parent=5 // pred_fallthru
        _
      %p210 = scmp.le.s32.totalorder 1, %s18
      %p211 = scmp.lt.s32.totalorder %s18, 3
      %p212 = pnand %p210, %p211
      %p213 = pneg %p212
      // Predicated region
      $region33: #{tpu_custom_call.1} parent=5 // pred_check
        _
      $region34: #{tpu_custom_call.1} parent=5 // pred_check_branch
        %215 = sbr.rel (%p212) target = $region36
      $region35: #{tpu_custom_call.1} parent=5 // pred_region
        %s216 = ssub.s32 %s18, 1
        %s217 = sand.u32 %s31, 1
        %s218 = scalar_lea.sflag [#allocation3], %s217
        %s219 = sand.u32 %s31, 1
        %s220 = smul.addr %s219, 32
        %s221 = scalar_lea.vmem [#allocation2], %s220
        // Predicated region
        $region37: #{tpu_custom_call.1} parent=35 // pred_check
          %p222 = pneg %p44
        $region38: #{tpu_custom_call.1} parent=35 // pred_check_branch
          %224 = sbr.rel (%p222) target = $region40
        $region39: #{tpu_custom_call.1} parent=35 // pred_region
          %225 = dma.done %s218, 512
        $region40: #{tpu_custom_call.1} parent=35 // pred_fallthru
          _
        // Predicated region
        $region41: #{tpu_custom_call.1} parent=35 // pred_check
          %p226 = pneg %p65
        $region42: #{tpu_custom_call.1} parent=35 // pred_check_branch
          %228 = sbr.rel (%p226) target = $region44
        $region43: #{tpu_custom_call.1} parent=35 // pred_region
          %229 = dma.done [#allocation6], 8192
        $region44: #{tpu_custom_call.1} parent=35 // pred_fallthru
          _
        // Predicated region
        $region45: #{tpu_custom_call.1} parent=35 // pred_check
          %p230 = pneg %p86
        $region46: #{tpu_custom_call.1} parent=35 // pred_check_branch
          %232 = sbr.rel (%p230) target = $region48
        $region47: #{tpu_custom_call.1} parent=35 // pred_region
          %233 = dma.done [#allocation6], 4096
        $region48: #{tpu_custom_call.1} parent=35 // pred_fallthru
          _
        // Predicated region
        $region49: #{tpu_custom_call.1} parent=35 // pred_check
          %p234 = pneg %p107
        $region50: #{tpu_custom_call.1} parent=35 // pred_check_branch
          %236 = sbr.rel (%p234) target = $region52
        $region51: #{tpu_custom_call.1} parent=35 // pred_region
          %237 = dma.done [#allocation9], 2048
        $region52: #{tpu_custom_call.1} parent=35 // pred_fallthru
          _
        %s238 = sand.u32 %s31, 1
        %s239 = scalar_lea.sflag [#allocation3], %s238
        %s240 = sand.u32 %s31, 1
        %s241 = smul.addr %s240, 32
        %s242 = scalar_lea.vmem [#allocation2], %s241
        %p243 = pneg %p44
        %p244 = pneg %p41
        %p245 = pneg %p65
        %p246 = pneg %p62
        %p247 = pneg %p86
        %p248 = pneg %p83
        %p249 = pneg %p107
        %p250 = pneg %p104
        %p251 = pneg %p133
        %p252 = pneg %p130
        %s253 = sand.u32 %s120, 1
        %s254 = scalar_lea.sflag [#allocation4], %s253
        %s255 = sand.u32 %s120, 1
        %s256 = smul.addr %s255, 8
        %s257 = scalar_lea.vmem [#allocation10], %s256
        %v259 = vlaneseq
        %v260 = vand.u32 %v259, 127
        %v261 = vadd.s32 %v260, 128
        %vm262 = vcmp.lt.s32.totalorder %v260, 0
        %v263 = vsub.s32 0, %v260
        %v264 = vsel %vm262, %v263, %v260
        %v265 = vshrl.u32 %v264, 4
        %v266 = vand.u32 %v264, 15
        %v267 = vsub.s32 0, %v266
        %v268 = vsel %vm262, %v267, %v266
        %vm269 = vcmp.lt.s32.totalorder %v261, 0
        %v270 = vsub.s32 0, %v261
        %v271 = vsel %vm269, %v270, %v261
        %v272 = vshrl.u32 %v271, 4
        %v273 = vand.u32 %v271, 15
        %v274 = vsub.s32 0, %v273
        %v275 = vsel %vm269, %v274, %v273
        %vm276 = vcmp.ne.s32.totalorder %v268, 0
        %vm277 = vcmp.ne.s32.totalorder %v275, 0
        %vm278 = vcmp.lt.s32.totalorder %v268, 0
        %vm279 = vcmp.lt.s32.totalorder %v275, 0
        %vm280 = vmand %vm278, %vm276
        %vm281 = vmand %vm279, %vm277
        %v282 = vadd.s32 %v268, 16
        %v283 = vadd.s32 %v275, 16
        %v284 = vsel %vm280, %v282, %v268
        %v285 = vsel %vm281, %v283, %v275
        %vm286 = vcmp.lt.s32.totalorder %v284, 4
        %vm287 = vcmp.lt.s32.totalorder %v285, 4
        %v288 = vld [vmem:[%s221] sm:$0xff]
        %v289 = vld [vmem:[%s221 + $0x8] sm:$0xff]
        %v290 = vld [vmem:[%s221 + $0x10] sm:$0xff]
        %v291 = vld [vmem:[%s221 + $0x18] sm:$0xff]
        %v292 = vpack.c.bf16 %v288, %v288
        %v293 = vpack.c.bf16 %v289, %v289
        %v294 = vpack.c.bf16 %v290, %v290
        %v295 = vpack.c.bf16 %v291, %v291
        %v296 = vld [vmem:[#allocation5] sm:$0xff]
        %v297 = vld [vmem:[#allocation5 + $0x8] sm:$0xff]
        %v298 = vld [vmem:[#allocation5 + $0x10] sm:$0xff]
        %v299 = vld [vmem:[#allocation5 + $0x18] sm:$0xff]
        %v300 = vld [vmem:[#allocation5 + $0x20] sm:$0xff]
        %v301 = vld [vmem:[#allocation5 + $0x28] sm:$0xff]
        %v302 = vld [vmem:[#allocation5 + $0x30] sm:$0xff]
        %v303 = vld [vmem:[#allocation5 + $0x38] sm:$0xff]
        %v304 = vld [vmem:[#allocation5 + $0x40] sm:$0xff]
        %v305 = vld [vmem:[#allocation5 + $0x48] sm:$0xff]
        %v306 = vld [vmem:[#allocation5 + $0x50] sm:$0xff]
        %v307 = vld [vmem:[#allocation5 + $0x58] sm:$0xff]
        %v308 = vld [vmem:[#allocation5 + $0x60] sm:$0xff]
        %v309 = vld [vmem:[#allocation5 + $0x68] sm:$0xff]
        %v310 = vld [vmem:[#allocation5 + $0x70] sm:$0xff]
        %v311 = vld [vmem:[#allocation5 + $0x78] sm:$0xff]
        %v312 = vld [vmem:[#allocation5 + $0x80] sm:$0xff]
        %v313 = vld [vmem:[#allocation5 + $0x88] sm:$0xff]
        %v314 = vld [vmem:[#allocation5 + $0x90] sm:$0xff]
        %v315 = vld [vmem:[#allocation5 + $0x98] sm:$0xff]
        %v316 = vld [vmem:[#allocation5 + $0xa0] sm:$0xff]
        %v317 = vld [vmem:[#allocation5 + $0xa8] sm:$0xff]
        %v318 = vld [vmem:[#allocation5 + $0xb0] sm:$0xff]
        %v319 = vld [vmem:[#allocation5 + $0xb8] sm:$0xff]
        %v320 = vld [vmem:[#allocation5 + $0xc0] sm:$0xff]
        %v321 = vld [vmem:[#allocation5 + $0xc8] sm:$0xff]
        %v322 = vld [vmem:[#allocation5 + $0xd0] sm:$0xff]
        %v323 = vld [vmem:[#allocation5 + $0xd8] sm:$0xff]
        %v324 = vld [vmem:[#allocation5 + $0xe0] sm:$0xff]
        %v325 = vld [vmem:[#allocation5 + $0xe8] sm:$0xff]
        %v326 = vld [vmem:[#allocation5 + $0xf0] sm:$0xff]
        %v327 = vld [vmem:[#allocation5 + $0xf8] sm:$0xff]
        %v328 = vld [vmem:[#allocation5 + $0x100] sm:$0xff]
        %v329 = vld [vmem:[#allocation5 + $0x108] sm:$0xff]
        %v330 = vld [vmem:[#allocation5 + $0x110] sm:$0xff]
        %v331 = vld [vmem:[#allocation5 + $0x118] sm:$0xff]
        %v332 = vld [vmem:[#allocation5 + $0x120] sm:$0xff]
        %v333 = vld [vmem:[#allocation5 + $0x128] sm:$0xff]
        %v334 = vld [vmem:[#allocation5 + $0x130] sm:$0xff]
        %v335 = vld [vmem:[#allocation5 + $0x138] sm:$0xff]
        %v336 = vld [vmem:[#allocation5 + $0x140] sm:$0xff]
        %v337 = vld [vmem:[#allocation5 + $0x148] sm:$0xff]
        %v338 = vld [vmem:[#allocation5 + $0x150] sm:$0xff]
        %v339 = vld [vmem:[#allocation5 + $0x158] sm:$0xff]
        %v340 = vld [vmem:[#allocation5 + $0x160] sm:$0xff]
        %v341 = vld [vmem:[#allocation5 + $0x168] sm:$0xff]
        %v342 = vld [vmem:[#allocation5 + $0x170] sm:$0xff]
        %v343 = vld [vmem:[#allocation5 + $0x178] sm:$0xff]
        %v344 = vld [vmem:[#allocation5 + $0x180] sm:$0xff]
        %v345 = vld [vmem:[#allocation5 + $0x188] sm:$0xff]
        %v346 = vld [vmem:[#allocation5 + $0x190] sm:$0xff]
        %v347 = vld [vmem:[#allocation5 + $0x198] sm:$0xff]
        %v348 = vld [vmem:[#allocation5 + $0x1a0] sm:$0xff]
        %v349 = vld [vmem:[#allocation5 + $0x1a8] sm:$0xff]
        %v350 = vld [vmem:[#allocation5 + $0x1b0] sm:$0xff]
        %v351 = vld [vmem:[#allocation5 + $0x1b8] sm:$0xff]
        %v352 = vld [vmem:[#allocation5 + $0x1c0] sm:$0xff]
        %v353 = vld [vmem:[#allocation5 + $0x1c8] sm:$0xff]
        %v354 = vld [vmem:[#allocation5 + $0x1d0] sm:$0xff]
        %v355 = vld [vmem:[#allocation5 + $0x1d8] sm:$0xff]
        %v356 = vld [vmem:[#allocation5 + $0x1e0] sm:$0xff]
        %v357 = vld [vmem:[#allocation5 + $0x1e8] sm:$0xff]
        %v358 = vld [vmem:[#allocation5 + $0x1f0] sm:$0xff]
        %v359 = vld [vmem:[#allocation5 + $0x1f8] sm:$0xff]
        %v424 = vunpack.c.l.b16 %v296
        %v425 = vunpack.c.h.b16 %v296
        %v426 = vunpack.c.l.b16 %v297
        %v427 = vunpack.c.h.b16 %v297
        %v428 = vunpack.c.l.b16 %v298
        %v429 = vunpack.c.h.b16 %v298
        %v430 = vunpack.c.l.b16 %v299
        %v431 = vunpack.c.h.b16 %v299
        %v432 = vunpack.c.l.b16 %v300
        %v433 = vunpack.c.h.b16 %v300
        %v434 = vunpack.c.l.b16 %v301
        %v435 = vunpack.c.h.b16 %v301
        %v436 = vunpack.c.l.b16 %v302
        %v437 = vunpack.c.h.b16 %v302
        %v438 = vunpack.c.l.b16 %v303
        %v439 = vunpack.c.h.b16 %v303
        %v440 = vunpack.c.l.b16 %v304
        %v441 = vunpack.c.h.b16 %v304
        %v442 = vunpack.c.l.b16 %v305
        %v443 = vunpack.c.h.b16 %v305
        %v444 = vunpack.c.l.b16 %v306
        %v445 = vunpack.c.h.b16 %v306
        %v446 = vunpack.c.l.b16 %v307
        %v447 = vunpack.c.h.b16 %v307
        %v448 = vunpack.c.l.b16 %v308
        %v449 = vunpack.c.h.b16 %v308
        %v450 = vunpack.c.l.b16 %v309
        %v451 = vunpack.c.h.b16 %v309
        %v452 = vunpack.c.l.b16 %v310
        %v453 = vunpack.c.h.b16 %v310
        %v454 = vunpack.c.l.b16 %v311
        %v455 = vunpack.c.h.b16 %v311
        %v456 = vunpack.c.l.b16 %v312
        %v457 = vunpack.c.h.b16 %v312
        %v458 = vunpack.c.l.b16 %v313
        %v459 = vunpack.c.h.b16 %v313
        %v460 = vunpack.c.l.b16 %v314
        %v461 = vunpack.c.h.b16 %v314
        %v462 = vunpack.c.l.b16 %v315
        %v463 = vunpack.c.h.b16 %v315
        %v464 = vunpack.c.l.b16 %v316
        %v465 = vunpack.c.h.b16 %v316
        %v466 = vunpack.c.l.b16 %v317
        %v467 = vunpack.c.h.b16 %v317
        %v468 = vunpack.c.l.b16 %v318
        %v469 = vunpack.c.h.b16 %v318
        %v470 = vunpack.c.l.b16 %v319
        %v471 = vunpack.c.h.b16 %v319
        %v472 = vunpack.c.l.b16 %v320
        %v473 = vunpack.c.h.b16 %v320
        %v474 = vunpack.c.l.b16 %v321
        %v475 = vunpack.c.h.b16 %v321
        %v476 = vunpack.c.l.b16 %v322
        %v477 = vunpack.c.h.b16 %v322
        %v478 = vunpack.c.l.b16 %v323
        %v479 = vunpack.c.h.b16 %v323
        %v480 = vunpack.c.l.b16 %v324
        %v481 = vunpack.c.h.b16 %v324
        %v482 = vunpack.c.l.b16 %v325
        %v483 = vunpack.c.h.b16 %v325
        %v484 = vunpack.c.l.b16 %v326
        %v485 = vunpack.c.h.b16 %v326
        %v486 = vunpack.c.l.b16 %v327
        %v487 = vunpack.c.h.b16 %v327
        %v488 = vunpack.c.l.b16 %v328
        %v489 = vunpack.c.h.b16 %v328
        %v490 = vunpack.c.l.b16 %v329
        %v491 = vunpack.c.h.b16 %v329
        %v492 = vunpack.c.l.b16 %v330
        %v493 = vunpack.c.h.b16 %v330
        %v494 = vunpack.c.l.b16 %v331
        %v495 = vunpack.c.h.b16 %v331
        %v496 = vunpack.c.l.b16 %v332
        %v497 = vunpack.c.h.b16 %v332
        %v498 = vunpack.c.l.b16 %v333
        %v499 = vunpack.c.h.b16 %v333
        %v500 = vunpack.c.l.b16 %v334
        %v501 = vunpack.c.h.b16 %v334
        %v502 = vunpack.c.l.b16 %v335
        %v503 = vunpack.c.h.b16 %v335
        %v504 = vunpack.c.l.b16 %v336
        %v505 = vunpack.c.h.b16 %v336
        %v506 = vunpack.c.l.b16 %v337
        %v507 = vunpack.c.h.b16 %v337
        %v508 = vunpack.c.l.b16 %v338
        %v509 = vunpack.c.h.b16 %v338
        %v510 = vunpack.c.l.b16 %v339
        %v511 = vunpack.c.h.b16 %v339
        %v512 = vunpack.c.l.b16 %v340
        %v513 = vunpack.c.h.b16 %v340
        %v514 = vunpack.c.l.b16 %v341
        %v515 = vunpack.c.h.b16 %v341
        %v516 = vunpack.c.l.b16 %v342
        %v517 = vunpack.c.h.b16 %v342
        %v518 = vunpack.c.l.b16 %v343
        %v519 = vunpack.c.h.b16 %v343
        %v520 = vunpack.c.l.b16 %v344
        %v521 = vunpack.c.h.b16 %v344
        %v522 = vunpack.c.l.b16 %v345
        %v523 = vunpack.c.h.b16 %v345
        %v524 = vunpack.c.l.b16 %v346
        %v525 = vunpack.c.h.b16 %v346
        %v526 = vunpack.c.l.b16 %v347
        %v527 = vunpack.c.h.b16 %v347
        %v528 = vunpack.c.l.b16 %v348
        %v529 = vunpack.c.h.b16 %v348
        %v530 = vunpack.c.l.b16 %v349
        %v531 = vunpack.c.h.b16 %v349
        %v532 = vunpack.c.l.b16 %v350
        %v533 = vunpack.c.h.b16 %v350
        %v534 = vunpack.c.l.b16 %v351
        %v535 = vunpack.c.h.b16 %v351
        %v536 = vunpack.c.l.b16 %v352
        %v537 = vunpack.c.h.b16 %v352
        %v538 = vunpack.c.l.b16 %v353
        %v539 = vunpack.c.h.b16 %v353
        %v540 = vunpack.c.l.b16 %v354
        %v541 = vunpack.c.h.b16 %v354
        %v542 = vunpack.c.l.b16 %v355
        %v543 = vunpack.c.h.b16 %v355
        %v544 = vunpack.c.l.b16 %v356
        %v545 = vunpack.c.h.b16 %v356
        %v546 = vunpack.c.l.b16 %v357
        %v547 = vunpack.c.h.b16 %v357
        %v548 = vunpack.c.l.b16 %v358
        %v549 = vunpack.c.h.b16 %v358
        %v550 = vunpack.c.l.b16 %v359
        %v551 = vunpack.c.h.b16 %v359
        %v552 = vpack.c.b16 %v426, %v424
        %v553 = vpack.c.b16 %v427, %v425
        %v554 = vpack.c.b16 %v430, %v428
        %v555 = vpack.c.b16 %v431, %v429
        %v556 = vpack.c.b16 %v434, %v432
        %v557 = vpack.c.b16 %v435, %v433
        %v558 = vpack.c.b16 %v438, %v436
        %v559 = vpack.c.b16 %v439, %v437
        %v560 = vpack.c.b16 %v442, %v440
        %v561 = vpack.c.b16 %v443, %v441
        %v562 = vpack.c.b16 %v446, %v444
        %v563 = vpack.c.b16 %v447, %v445
        %v564 = vpack.c.b16 %v450, %v448
        %v565 = vpack.c.b16 %v451, %v449
        %v566 = vpack.c.b16 %v454, %v452
        %v567 = vpack.c.b16 %v455, %v453
        %v568 = vpack.c.b16 %v458, %v456
        %v569 = vpack.c.b16 %v459, %v457
        %v570 = vpack.c.b16 %v462, %v460
        %v571 = vpack.c.b16 %v463, %v461
        %v572 = vpack.c.b16 %v466, %v464
        %v573 = vpack.c.b16 %v467, %v465
        %v574 = vpack.c.b16 %v470, %v468
        %v575 = vpack.c.b16 %v471, %v469
        %v576 = vpack.c.b16 %v474, %v472
        %v577 = vpack.c.b16 %v475, %v473
        %v578 = vpack.c.b16 %v478, %v476
        %v579 = vpack.c.b16 %v479, %v477
        %v580 = vpack.c.b16 %v482, %v480
        %v581 = vpack.c.b16 %v483, %v481
        %v582 = vpack.c.b16 %v486, %v484
        %v583 = vpack.c.b16 %v487, %v485
        %v584 = vpack.c.b16 %v490, %v488
        %v585 = vpack.c.b16 %v491, %v489
        %v586 = vpack.c.b16 %v494, %v492
        %v587 = vpack.c.b16 %v495, %v493
        %v588 = vpack.c.b16 %v498, %v496
        %v589 = vpack.c.b16 %v499, %v497
        %v590 = vpack.c.b16 %v502, %v500
        %v591 = vpack.c.b16 %v503, %v501
        %v592 = vpack.c.b16 %v506, %v504
        %v593 = vpack.c.b16 %v507, %v505
        %v594 = vpack.c.b16 %v510, %v508
        %v595 = vpack.c.b16 %v511, %v509
        %v596 = vpack.c.b16 %v514, %v512
        %v597 = vpack.c.b16 %v515, %v513
        %v598 = vpack.c.b16 %v518, %v516
        %v599 = vpack.c.b16 %v519, %v517
        %v600 = vpack.c.b16 %v522, %v520
        %v601 = vpack.c.b16 %v523, %v521
        %v602 = vpack.c.b16 %v526, %v524
        %v603 = vpack.c.b16 %v527, %v525
        %v604 = vpack.c.b16 %v530, %v528
        %v605 = vpack.c.b16 %v531, %v529
        %v606 = vpack.c.b16 %v534, %v532
        %v607 = vpack.c.b16 %v535, %v533
        %v608 = vpack.c.b16 %v538, %v536
        %v609 = vpack.c.b16 %v539, %v537
        %v610 = vpack.c.b16 %v542, %v540
        %v611 = vpack.c.b16 %v543, %v541
        %v612 = vpack.c.b16 %v546, %v544
        %v613 = vpack.c.b16 %v547, %v545
        %v614 = vpack.c.b16 %v550, %v548
        %v615 = vpack.c.b16 %v551, %v549
        %680 = vmatprep.subr.bf16.mxu0 %v553
        %681 = vmatpush1.bf16.msra.mxu0 %v552
        %682 = vmatprep.subr.bf16.mxu0 %v555
        %683 = vmatpush1.bf16.msra.mxu0 %v554
        %684 = vmatprep.subr.bf16.mxu0 %v557
        %685 = vmatpush1.bf16.msra.mxu0 %v556
        %686 = vmatprep.subr.bf16.mxu0 %v559
        %687 = vmatpush1.bf16.msra.mxu0 %v558
        %688 = vmatprep.subr.bf16.mxu0 %v561
        %689 = vmatpush1.bf16.msra.mxu0 %v560
        %690 = vmatprep.subr.bf16.mxu0 %v563
        %691 = vmatpush1.bf16.msra.mxu0 %v562
        %692 = vmatprep.subr.bf16.mxu0 %v565
        %693 = vmatpush1.bf16.msra.mxu0 %v564
        %694 = vmatprep.subr.bf16.mxu0 %v567
        %695 = vmatpush1.bf16.msra.mxu0 %v566
        %696 = vmatprep.subr.bf16.mxu0 %v569
        %697 = vmatpush1.bf16.msra.mxu0 %v568
        %698 = vmatprep.subr.bf16.mxu0 %v571
        %699 = vmatpush1.bf16.msra.mxu0 %v570
        %700 = vmatprep.subr.bf16.mxu0 %v573
        %701 = vmatpush1.bf16.msra.mxu0 %v572
        %702 = vmatprep.subr.bf16.mxu0 %v575
        %703 = vmatpush1.bf16.msra.mxu0 %v574
        %704 = vmatprep.subr.bf16.mxu0 %v577
        %705 = vmatpush1.bf16.msra.mxu0 %v576
        %706 = vmatprep.subr.bf16.mxu0 %v579
        %707 = vmatpush1.bf16.msra.mxu0 %v578
        %708 = vmatprep.subr.bf16.mxu0 %v581
        %709 = vmatpush1.bf16.msra.mxu0 %v580
        %710 = vmatprep.subr.bf16.mxu0 %v583
        %711 = vmatpush1.bf16.msra.mxu0 %v582
        %712 = vmatprep.mubr.bf16.mxu0 %v293
        %713 = vmatmul.mubr.bf16.gmra.mrb[0].mxu0 %v292
        %v714 = vpop.f32.mrb[0].mxu0
        %v715 = vadd.f32 0.0, %v714
        %v716 = vpop.f32.mrb[0].mxu0
        %v717 = vadd.f32 0.0, %v716
        %v718 = vpop.f32.mrb[0].mxu0
        %v719 = vpop.f32.mrb[0].mxu0
        %720 = vdwg.mxu0
        %721 = vmatprep.subr.bf16.mxu0 %v585
        %722 = vmatpush1.bf16.msra.mxu0 %v584
        %723 = vmatprep.subr.bf16.mxu0 %v587
        %724 = vmatpush1.bf16.msra.mxu0 %v586
        %725 = vmatprep.subr.bf16.mxu0 %v589
        %726 = vmatpush1.bf16.msra.mxu0 %v588
        %727 = vmatprep.subr.bf16.mxu0 %v591
        %728 = vmatpush1.bf16.msra.mxu0 %v590
        %729 = vmatprep.subr.bf16.mxu0 %v593
        %730 = vmatpush1.bf16.msra.mxu0 %v592
        %731 = vmatprep.subr.bf16.mxu0 %v595
        %732 = vmatpush1.bf16.msra.mxu0 %v594
        %733 = vmatprep.subr.bf16.mxu0 %v597
        %734 = vmatpush1.bf16.msra.mxu0 %v596
        %735 = vmatprep.subr.bf16.mxu0 %v599
        %736 = vmatpush1.bf16.msra.mxu0 %v598
        %737 = vmatprep.subr.bf16.mxu0 %v601
        %738 = vmatpush1.bf16.msra.mxu0 %v600
        %739 = vmatprep.subr.bf16.mxu0 %v603
        %740 = vmatpush1.bf16.msra.mxu0 %v602
        %741 = vmatprep.subr.bf16.mxu0 %v605
        %742 = vmatpush1.bf16.msra.mxu0 %v604
        %743 = vmatprep.subr.bf16.mxu0 %v607
        %744 = vmatpush1.bf16.msra.mxu0 %v606
        %745 = vmatprep.subr.bf16.mxu0 %v609
        %746 = vmatpush1.bf16.msra.mxu0 %v608
        %747 = vmatprep.subr.bf16.mxu0 %v611
        %748 = vmatpush1.bf16.msra.mxu0 %v610
        %749 = vmatprep.subr.bf16.mxu0 %v613
        %750 = vmatpush1.bf16.msra.mxu0 %v612
        %751 = vmatprep.subr.bf16.mxu0 %v615
        %752 = vmatpush1.bf16.msra.mxu0 %v614
        %753 = vmatprep.mubr.bf16.mxu0 %v295
        %754 = vmatmul.mubr.bf16.gmra.mrb[0].mxu0 %v294
        %v755 = vpop.f32.mrb[0].mxu0
        %v756 = vadd.f32 %v715, %v755
        %v757 = vpop.f32.mrb[0].mxu0
        %v758 = vadd.f32 %v717, %v757
        %v759 = vpop.f32.mrb[0].mxu0
        %v760 = vpop.f32.mrb[0].mxu0
        %761 = vdwg.mxu0
        %v762 = vxor.u32 %v756, 2147483648
        %v763 = vxor.u32 %v758, 2147483648
        %v764 = vmul.f32 %v762, 1.442695
        %v765 = vpow.pop %v764
        %v766 = vmul.f32 %v763, 1.442695
        %v767 = vpow.pop %v766
        %v768 = vadd.f32 %v765, 1.0
        %v769 = vadd.f32 %v767, 1.0
        %v770 = vrcp.pop %v768
        %v771 = vmul.f32 1.0, %v770
        %v772 = vrcp.pop %v769
        %v773 = vmul.f32 1.0, %v772
        %v774 = vmul.f32 %v756, %v771
        %v775 = vmul.f32 %v758, %v773
        %v776 = vsel %vm286, 1, 0
        %v777 = vsel %vm287, 1, 0
        %vm778 = vcmp.eq.s32.totalorder %v776, 1
        %vm779 = vcmp.eq.s32.totalorder %v777, 1
        %v780 = vsel %vm778, %v774, %v756
        %v781 = vsel %vm779, %v775, %v758
        %v782 = vpack.c.bf16 %v780, %v780
        %v783 = vpack.c.bf16 %v781, %v781
        %v784 = vld [vmem:[#allocation7] sm:$0xff]
        %v785 = vld [vmem:[#allocation7 + $0x8] sm:$0xff]
        %v786 = vld [vmem:[#allocation7 + $0x10] sm:$0xff]
        %v787 = vld [vmem:[#allocation7 + $0x18] sm:$0xff]
        %v788 = vld [vmem:[#allocation7 + $0x20] sm:$0xff]
        %v789 = vld [vmem:[#allocation7 + $0x28] sm:$0xff]
        %v790 = vld [vmem:[#allocation7 + $0x30] sm:$0xff]
        %v791 = vld [vmem:[#allocation7 + $0x38] sm:$0xff]
        %v792 = vld [vmem:[#allocation7 + $0x40] sm:$0xff]
        %v793 = vld [vmem:[#allocation7 + $0x48] sm:$0xff]
        %v794 = vld [vmem:[#allocation7 + $0x50] sm:$0xff]
        %v795 = vld [vmem:[#allocation7 + $0x58] sm:$0xff]
        %v796 = vld [vmem:[#allocation7 + $0x60] sm:$0xff]
        %v797 = vld [vmem:[#allocation7 + $0x68] sm:$0xff]
        %v798 = vld [vmem:[#allocation7 + $0x70] sm:$0xff]
        %v799 = vld [vmem:[#allocation7 + $0x78] sm:$0xff]
        %v800 = vld [vmem:[#allocation7 + $0x80] sm:$0xff]
        %v801 = vld [vmem:[#allocation7 + $0x88] sm:$0xff]
        %v802 = vld [vmem:[#allocation7 + $0x90] sm:$0xff]
        %v803 = vld [vmem:[#allocation7 + $0x98] sm:$0xff]
        %v804 = vld [vmem:[#allocation7 + $0xa0] sm:$0xff]
        %v805 = vld [vmem:[#allocation7 + $0xa8] sm:$0xff]
        %v806 = vld [vmem:[#allocation7 + $0xb0] sm:$0xff]
        %v807 = vld [vmem:[#allocation7 + $0xb8] sm:$0xff]
        %v808 = vld [vmem:[#allocation7 + $0xc0] sm:$0xff]
        %v809 = vld [vmem:[#allocation7 + $0xc8] sm:$0xff]
        %v810 = vld [vmem:[#allocation7 + $0xd0] sm:$0xff]
        %v811 = vld [vmem:[#allocation7 + $0xd8] sm:$0xff]
        %v812 = vld [vmem:[#allocation7 + $0xe0] sm:$0xff]
        %v813 = vld [vmem:[#allocation7 + $0xe8] sm:$0xff]
        %v814 = vld [vmem:[#allocation7 + $0xf0] sm:$0xff]
        %v815 = vld [vmem:[#allocation7 + $0xf8] sm:$0xff]
        %v848 = vunpack.c.l.b16 %v784
        %v849 = vunpack.c.h.b16 %v784
        %v850 = vunpack.c.l.b16 %v785
        %v851 = vunpack.c.h.b16 %v785
        %v852 = vunpack.c.l.b16 %v786
        %v853 = vunpack.c.h.b16 %v786
        %v854 = vunpack.c.l.b16 %v787
        %v855 = vunpack.c.h.b16 %v787
        %v856 = vunpack.c.l.b16 %v788
        %v857 = vunpack.c.h.b16 %v788
        %v858 = vunpack.c.l.b16 %v789
        %v859 = vunpack.c.h.b16 %v789
        %v860 = vunpack.c.l.b16 %v790
        %v861 = vunpack.c.h.b16 %v790
        %v862 = vunpack.c.l.b16 %v791
        %v863 = vunpack.c.h.b16 %v791
        %v864 = vunpack.c.l.b16 %v792
        %v865 = vunpack.c.h.b16 %v792
        %v866 = vunpack.c.l.b16 %v793
        %v867 = vunpack.c.h.b16 %v793
        %v868 = vunpack.c.l.b16 %v794
        %v869 = vunpack.c.h.b16 %v794
        %v870 = vunpack.c.l.b16 %v795
        %v871 = vunpack.c.h.b16 %v795
        %v872 = vunpack.c.l.b16 %v796
        %v873 = vunpack.c.h.b16 %v796
        %v874 = vunpack.c.l.b16 %v797
        %v875 = vunpack.c.h.b16 %v797
        %v876 = vunpack.c.l.b16 %v798
        %v877 = vunpack.c.h.b16 %v798
        %v878 = vunpack.c.l.b16 %v799
        %v879 = vunpack.c.h.b16 %v799
        %v880 = vunpack.c.l.b16 %v800
        %v881 = vunpack.c.h.b16 %v800
        %v882 = vunpack.c.l.b16 %v801
        %v883 = vunpack.c.h.b16 %v801
        %v884 = vunpack.c.l.b16 %v802
        %v885 = vunpack.c.h.b16 %v802
        %v886 = vunpack.c.l.b16 %v803
        %v887 = vunpack.c.h.b16 %v803
        %v888 = vunpack.c.l.b16 %v804
        %v889 = vunpack.c.h.b16 %v804
        %v890 = vunpack.c.l.b16 %v805
        %v891 = vunpack.c.h.b16 %v805
        %v892 = vunpack.c.l.b16 %v806
        %v893 = vunpack.c.h.b16 %v806
        %v894 = vunpack.c.l.b16 %v807
        %v895 = vunpack.c.h.b16 %v807
        %v896 = vunpack.c.l.b16 %v808
        %v897 = vunpack.c.h.b16 %v808
        %v898 = vunpack.c.l.b16 %v809
        %v899 = vunpack.c.h.b16 %v809
        %v900 = vunpack.c.l.b16 %v810
        %v901 = vunpack.c.h.b16 %v810
        %v902 = vunpack.c.l.b16 %v811
        %v903 = vunpack.c.h.b16 %v811
        %v904 = vunpack.c.l.b16 %v812
        %v905 = vunpack.c.h.b16 %v812
        %v906 = vunpack.c.l.b16 %v813
        %v907 = vunpack.c.h.b16 %v813
        %v908 = vunpack.c.l.b16 %v814
        %v909 = vunpack.c.h.b16 %v814
        %v910 = vunpack.c.l.b16 %v815
        %v911 = vunpack.c.h.b16 %v815
        %v912 = vpack.c.b16 %v850, %v848
        %v913 = vpack.c.b16 %v851, %v849
        %v914 = vpack.c.b16 %v854, %v852
        %v915 = vpack.c.b16 %v855, %v853
        %v916 = vpack.c.b16 %v858, %v856
        %v917 = vpack.c.b16 %v859, %v857
        %v918 = vpack.c.b16 %v862, %v860
        %v919 = vpack.c.b16 %v863, %v861
        %v920 = vpack.c.b16 %v866, %v864
        %v921 = vpack.c.b16 %v867, %v865
        %v922 = vpack.c.b16 %v870, %v868
        %v923 = vpack.c.b16 %v871, %v869
        %v924 = vpack.c.b16 %v874, %v872
        %v925 = vpack.c.b16 %v875, %v873
        %v926 = vpack.c.b16 %v878, %v876
        %v927 = vpack.c.b16 %v879, %v877
        %v928 = vpack.c.b16 %v882, %v880
        %v929 = vpack.c.b16 %v883, %v881
        %v930 = vpack.c.b16 %v886, %v884
        %v931 = vpack.c.b16 %v887, %v885
        %v932 = vpack.c.b16 %v890, %v888
        %v933 = vpack.c.b16 %v891, %v889
        %v934 = vpack.c.b16 %v894, %v892
        %v935 = vpack.c.b16 %v895, %v893
        %v936 = vpack.c.b16 %v898, %v896
        %v937 = vpack.c.b16 %v899, %v897
        %v938 = vpack.c.b16 %v902, %v900
        %v939 = vpack.c.b16 %v903, %v901
        %v940 = vpack.c.b16 %v906, %v904
        %v941 = vpack.c.b16 %v907, %v905
        %v942 = vpack.c.b16 %v910, %v908
        %v943 = vpack.c.b16 %v911, %v909
        %976 = vmatprep.subr.bf16.mxu0 %v913
        %977 = vmatpush1.bf16.msra.mxu0 %v912
        %978 = vmatprep.subr.bf16.mxu0 %v915
        %979 = vmatpush1.bf16.msra.mxu0 %v914
        %980 = vmatprep.subr.bf16.mxu0 %v917
        %981 = vmatpush1.bf16.msra.mxu0 %v916
        %982 = vmatprep.subr.bf16.mxu0 %v919
        %983 = vmatpush1.bf16.msra.mxu0 %v918
        %984 = vmatprep.subr.bf16.mxu0 %v921
        %985 = vmatpush1.bf16.msra.mxu0 %v920
        %986 = vmatprep.subr.bf16.mxu0 %v923
        %987 = vmatpush1.bf16.msra.mxu0 %v922
        %988 = vmatprep.subr.bf16.mxu0 %v925
        %989 = vmatpush1.bf16.msra.mxu0 %v924
        %990 = vmatprep.subr.bf16.mxu0 %v927
        %991 = vmatpush1.bf16.msra.mxu0 %v926
        %992 = vmatprep.subr.bf16.mxu0 %v929
        %993 = vmatpush1.bf16.msra.mxu0 %v928
        %994 = vmatprep.subr.bf16.mxu0 %v931
        %995 = vmatpush1.bf16.msra.mxu0 %v930
        %996 = vmatprep.subr.bf16.mxu0 %v933
        %997 = vmatpush1.bf16.msra.mxu0 %v932
        %998 = vmatprep.subr.bf16.mxu0 %v935
        %999 = vmatpush1.bf16.msra.mxu0 %v934
        %1000 = vmatprep.subr.bf16.mxu0 %v937
        %1001 = vmatpush1.bf16.msra.mxu0 %v936
        %1002 = vmatprep.subr.bf16.mxu0 %v939
        %1003 = vmatpush1.bf16.msra.mxu0 %v938
        %1004 = vmatprep.subr.bf16.mxu0 %v941
        %1005 = vmatpush1.bf16.msra.mxu0 %v940
        %1006 = vmatprep.subr.bf16.mxu0 %v943
        %1007 = vmatpush1.bf16.msra.mxu0 %v942
        %1008 = vmatprep.mubr.bf16.mxu0 %v783
        %1009 = vmatmul.mubr.bf16.gmra.mrb[0].mxu0 %v782
        %v1010 = vpop.f32.mrb[0].mxu0
        %v1011 = vadd.f32 0.0, %v1010
        %v1012 = vpop.f32.mrb[0].mxu0
        %v1013 = vadd.f32 0.0, %v1012
        %v1014 = vpop.f32.mrb[0].mxu0
        %v1015 = vpop.f32.mrb[0].mxu0
        %1016 = vdwg.mxu0
        %v1017 = vxor.u32 %v1011, 2147483648
        %v1018 = vxor.u32 %v1013, 2147483648
        %v1019 = vmul.f32 %v1017, 1.442695
        %v1020 = vpow.pop %v1019
        %v1021 = vmul.f32 %v1018, 1.442695
        %v1022 = vpow.pop %v1021
        %v1023 = vadd.f32 %v1020, 1.0
        %v1024 = vadd.f32 %v1022, 1.0
        %v1025 = vrcp.pop %v1023
        %v1026 = vmul.f32 1.0, %v1025
        %v1027 = vrcp.pop %v1024
        %v1028 = vmul.f32 1.0, %v1027
        %v1029 = vmul.f32 %v1011, %v1026
        %v1030 = vmul.f32 %v1013, %v1028
        %v1031 = vsel %vm778, %v1029, %v1011
        %v1032 = vsel %vm779, %v1030, %v1013
        %v1033 = vpack.c.bf16 %v1031, %v1031
        %v1034 = vpack.c.bf16 %v1032, %v1032
        %v1035 = vld [vmem:[#allocation8] sm:$0xf]
        %v1036 = vld [vmem:[#allocation8 + $0x4] sm:$0xf]
        %v1037 = vld [vmem:[#allocation8 + $0x8] sm:$0xf]
        %v1038 = vld [vmem:[#allocation8 + $0xc] sm:$0xf]
        %v1039 = vld [vmem:[#allocation8 + $0x10] sm:$0xf]
        %v1040 = vld [vmem:[#allocation8 + $0x14] sm:$0xf]
        %v1041 = vld [vmem:[#allocation8 + $0x18] sm:$0xf]
        %v1042 = vld [vmem:[#allocation8 + $0x1c] sm:$0xf]
        %v1043 = vld [vmem:[#allocation8 + $0x20] sm:$0xf]
        %v1044 = vld [vmem:[#allocation8 + $0x24] sm:$0xf]
        %v1045 = vld [vmem:[#allocation8 + $0x28] sm:$0xf]
        %v1046 = vld [vmem:[#allocation8 + $0x2c] sm:$0xf]
        %v1047 = vld [vmem:[#allocation8 + $0x30] sm:$0xf]
        %v1048 = vld [vmem:[#allocation8 + $0x34] sm:$0xf]
        %v1049 = vld [vmem:[#allocation8 + $0x38] sm:$0xf]
        %v1050 = vld [vmem:[#allocation8 + $0x3c] sm:$0xf]
        %v1051 = vld [vmem:[#allocation8 + $0x40] sm:$0xf]
        %v1052 = vld [vmem:[#allocation8 + $0x44] sm:$0xf]
        %v1053 = vld [vmem:[#allocation8 + $0x48] sm:$0xf]
        %v1054 = vld [vmem:[#allocation8 + $0x4c] sm:$0xf]
        %v1055 = vld [vmem:[#allocation8 + $0x50] sm:$0xf]
        %v1056 = vld [vmem:[#allocation8 + $0x54] sm:$0xf]
        %v1057 = vld [vmem:[#allocation8 + $0x58] sm:$0xf]
        %v1058 = vld [vmem:[#allocation8 + $0x5c] sm:$0xf]
        %v1059 = vld [vmem:[#allocation8 + $0x60] sm:$0xf]
        %v1060 = vld [vmem:[#allocation8 + $0x64] sm:$0xf]
        %v1061 = vld [vmem:[#allocation8 + $0x68] sm:$0xf]
        %v1062 = vld [vmem:[#allocation8 + $0x6c] sm:$0xf]
        %v1063 = vld [vmem:[#allocation8 + $0x70] sm:$0xf]
        %v1064 = vld [vmem:[#allocation8 + $0x74] sm:$0xf]
        %v1065 = vld [vmem:[#allocation8 + $0x78] sm:$0xf]
        %v1066 = vld [vmem:[#allocation8 + $0x7c] sm:$0xf]
        %v1099 = vunpack.c.l.b16 %v1035
        %v1100 = vunpack.c.l.b16 %v1036
        %v1101 = vunpack.c.l.b16 %v1037
        %v1102 = vunpack.c.l.b16 %v1038
        %v1103 = vunpack.c.l.b16 %v1039
        %v1104 = vunpack.c.l.b16 %v1040
        %v1105 = vunpack.c.l.b16 %v1041
        %v1106 = vunpack.c.l.b16 %v1042
        %v1107 = vunpack.c.l.b16 %v1043
        %v1108 = vunpack.c.l.b16 %v1044
        %v1109 = vunpack.c.l.b16 %v1045
        %v1110 = vunpack.c.l.b16 %v1046
        %v1111 = vunpack.c.l.b16 %v1047
        %v1112 = vunpack.c.l.b16 %v1048
        %v1113 = vunpack.c.l.b16 %v1049
        %v1114 = vunpack.c.l.b16 %v1050
        %v1115 = vunpack.c.l.b16 %v1051
        %v1116 = vunpack.c.l.b16 %v1052
        %v1117 = vunpack.c.l.b16 %v1053
        %v1118 = vunpack.c.l.b16 %v1054
        %v1119 = vunpack.c.l.b16 %v1055
        %v1120 = vunpack.c.l.b16 %v1056
        %v1121 = vunpack.c.l.b16 %v1057
        %v1122 = vunpack.c.l.b16 %v1058
        %v1123 = vunpack.c.l.b16 %v1059
        %v1124 = vunpack.c.l.b16 %v1060
        %v1125 = vunpack.c.l.b16 %v1061
        %v1126 = vunpack.c.l.b16 %v1062
        %v1127 = vunpack.c.l.b16 %v1063
        %v1128 = vunpack.c.l.b16 %v1064
        %v1129 = vunpack.c.l.b16 %v1065
        %v1130 = vunpack.c.l.b16 %v1066
        %v1131 = vpack.c.b16 %v1100, %v1099
        %v1132 = vpack.c.b16 %v1102, %v1101
        %v1133 = vpack.c.b16 %v1104, %v1103
        %v1134 = vpack.c.b16 %v1106, %v1105
        %v1135 = vpack.c.b16 %v1108, %v1107
        %v1136 = vpack.c.b16 %v1110, %v1109
        %v1137 = vpack.c.b16 %v1112, %v1111
        %v1138 = vpack.c.b16 %v1114, %v1113
        %v1139 = vpack.c.b16 %v1116, %v1115
        %v1140 = vpack.c.b16 %v1118, %v1117
        %v1141 = vpack.c.b16 %v1120, %v1119
        %v1142 = vpack.c.b16 %v1122, %v1121
        %v1143 = vpack.c.b16 %v1124, %v1123
        %v1144 = vpack.c.b16 %v1126, %v1125
        %v1145 = vpack.c.b16 %v1128, %v1127
        %v1146 = vpack.c.b16 %v1130, %v1129
        %1163 = vmatprep.subr.bf16.mxu0 0
        %1164 = vmatpush1.bf16.msra.mxu0 %v1131
        %1165 = vmatprep.subr.bf16.mxu0 0
        %1166 = vmatpush1.bf16.msra.mxu0 %v1132
        %1167 = vmatprep.subr.bf16.mxu0 0
        %1168 = vmatpush1.bf16.msra.mxu0 %v1133
        %1169 = vmatprep.subr.bf16.mxu0 0
        %1170 = vmatpush1.bf16.msra.mxu0 %v1134
        %1171 = vmatprep.subr.bf16.mxu0 0
        %1172 = vmatpush1.bf16.msra.mxu0 %v1135
        %1173 = vmatprep.subr.bf16.mxu0 0
        %1174 = vmatpush1.bf16.msra.mxu0 %v1136
        %1175 = vmatprep.subr.bf16.mxu0 0
        %1176 = vmatpush1.bf16.msra.mxu0 %v1137
        %1177 = vmatprep.subr.bf16.mxu0 0
        %1178 = vmatpush1.bf16.msra.mxu0 %v1138
        %1179 = vmatprep.subr.bf16.mxu0 0
        %1180 = vmatpush1.bf16.msra.mxu0 %v1139
        %1181 = vmatprep.subr.bf16.mxu0 0
        %1182 = vmatpush1.bf16.msra.mxu0 %v1140
        %1183 = vmatprep.subr.bf16.mxu0 0
        %1184 = vmatpush1.bf16.msra.mxu0 %v1141
        %1185 = vmatprep.subr.bf16.mxu0 0
        %1186 = vmatpush1.bf16.msra.mxu0 %v1142
        %1187 = vmatprep.subr.bf16.mxu0 0
        %1188 = vmatpush1.bf16.msra.mxu0 %v1143
        %1189 = vmatprep.subr.bf16.mxu0 0
        %1190 = vmatpush1.bf16.msra.mxu0 %v1144
        %1191 = vmatprep.subr.bf16.mxu0 0
        %1192 = vmatpush1.bf16.msra.mxu0 %v1145
        %1193 = vmatprep.subr.bf16.mxu0 0
        %1194 = vmatpush1.bf16.msra.mxu0 %v1146
        %1195 = vmatprep.mubr.bf16.mxu0 %v1034
        %1196 = vmatmul.mubr.bf16.gmra.mrb[0].mxu0 %v1033
        %v1197 = vpop.f32.mrb[0].mxu0
        %v1198 = vadd.f32 0.0, %v1197
        %v1199 = vpop.f32.mrb[0].mxu0
        %v1200 = vpop.f32.mrb[0].mxu0
        %v1201 = vpop.f32.mrb[0].mxu0
        %1202 = vdwg.mxu0
        %1203 = vst [vmem:[%s257] sm:$0xff] %v1198
        %s1204 = sand.u32 %s120, 1
        %s1205 = scalar_lea.sflag [#allocation4], %s1204
        %s1206 = sand.u32 %s120, 1
        %s1207 = smul.addr %s1206, 8
        %s1208 = scalar_lea.vmem [#allocation10], %s1207
        // Predicated region
        $region53: #{tpu_custom_call.1} parent=35 // pred_check
          %p1209 = pneg %p130
        $region54: #{tpu_custom_call.1} parent=35 // pred_check_branch
          %1211 = sbr.rel (%p1209) target = $region56
        $region55: #{tpu_custom_call.1} parent=35 // pred_region
          %s1213 = ssub.s32 128, 128
          %1214 = vsyncadd %s1205, %s1213
          %s1215 = smul.addr %s23, 128
          %s1216 = scalar_lea.hbm %s4, %s1215
          %s1218 = sshll.u32 %s1208, 4
          %s1219 = int_to_ptr.vmem [resolvable:$true] %s1218
          %1221 = dma.vmem_to_hbm [thread:$0]  %s1219, 128, %s1216, %s1205
        $region56: #{tpu_custom_call.1} parent=35 // pred_fallthru
          _
      $region36: #{tpu_custom_call.1} parent=5 // pred_fallthru
        _
      %p1222 = scmp.le.s32.totalorder 2, %s18
      // Predicated region
      $region57: #{tpu_custom_call.1} parent=5 // pred_check
        %p1223 = pneg %p1222
      $region58: #{tpu_custom_call.1} parent=5 // pred_check_branch
        %1225 = sbr.rel (%p1223) target = $region60
      $region59: #{tpu_custom_call.1} parent=5 // pred_region
        %s1226 = ssub.s32 %s18, 2
        // Predicated region
        $region61: #{tpu_custom_call.1} parent=59 // pred_check
          %p1227 = pneg %p136
        $region62: #{tpu_custom_call.1} parent=59 // pred_check_branch
          %1229 = sbr.rel (%p1227) target = $region64
        $region63: #{tpu_custom_call.1} parent=59 // pred_region
          %s1230 = sand.u32 %s121, 1
          %s1231 = scalar_lea.sflag [#allocation4], %s1230
          %s1232 = sand.u32 %s121, 1
          %s1233 = smul.addr %s1232, 8
          %s1234 = scalar_lea.vmem [#allocation10], %s1233
          %1235 = dma.done %s1231, 128
        $region64: #{tpu_custom_call.1} parent=59 // pred_fallthru
          _
      $region60: #{tpu_custom_call.1} parent=5 // pred_fallthru
        _
    $region6: #{tpu_custom_call.1} parent=1 // loop_footer
      %s22 = sadd.s32 1, %s18
    $region7: #{tpu_custom_call.1} parent=1 // loop_footer_branch
      %17 = sbr.rel target = $region3
    $region8: #{tpu_custom_call.1} parent=1 // loop_exit
      _
    %1236 = vsyncpa [#allocation3], 1
    %s1237 = scalar_lea.sflag [#allocation3], 1
    %1238 = vsyncpa %s1237, 1
    %1239 = vsyncpa [#allocation6], 1
    %1240 = vsyncpa [#allocation9], 1
    %1241 = vsyncpa [#allocation4], 1
    %s1242 = scalar_lea.sflag [#allocation4], 1
    %1243 = vsyncpa %s1242, 1

</llo_original>
